<compile_context>
chip_gen: v5e
topology: v5e:2x2
jax: 0.10.0
libtpu: 0.0.40
codegen_flags: <defaults>
</compile_context>

<pallas_src>
import jax
import jax.numpy as jnp
from jax.experimental import pallas as pl
from jax.experimental.pallas import tpu as pltpu


def _round_up(x, m):
    return ((x + m - 1) // m) * m


# --------------------------------------------------------------------------- #
# Pallas kernel: per-pixel statistics                                          #
# --------------------------------------------------------------------------- #
def _make_pixel_kernel(ignore_index):
    def kernel(pred_ref, aux_ref, tgt_ref, w_ref, out_ref):
        # pred_ref / aux_ref : (C, T) logits (batch dim squeezed), f32 or bf16
        # tgt_ref            : (1, T) int32 labels
        # w_ref              : (C, 1) per-class weights (f32)
        # out_ref            : (4, T) f32; rows = [prob_gt, nll_main, nll_aux, w_gt]
        x = pred_ref[...].astype(jnp.float32)
        xa = aux_ref[...].astype(jnp.float32)
        tgt = tgt_ref[...]
        wv = w_ref[...].astype(jnp.float32)

        valid = tgt != ignore_index                             # (1, T)
        tgt_c = jnp.where(valid, tgt, 0)                        # clamp ignored to class 0

        cls = jax.lax.broadcasted_iota(jnp.int32, x.shape, 0)   # (C, T)
        onehot = (cls == tgt_c).astype(jnp.float32)             # (C, T)

        def nll_of(logits):
            m = jnp.max(logits, axis=0, keepdims=True)                        # (1, T)
            lse = m + jnp.log(jnp.sum(jnp.exp(logits - m), axis=0, keepdims=True))
            logit_t = jnp.sum(logits * onehot, axis=0, keepdims=True)
            return lse - logit_t                                              # (1, T)

        nll_m = nll_of(x)
        nll_a = nll_of(xa)
        prob_t = jnp.where(valid, jnp.exp(-nll_m), 1.0)   # masked_fill_(~valid, 1)
        w_t = jnp.sum(wv * onehot, axis=0, keepdims=True)

        # Single packed store (one output block DMA per grid step).
        # NOTE: on a ragged last tile the lanes past hw hold garbage; Pallas
        # masks them on writeback so they never reach HBM.  Any in-kernel
        # cross-lane accumulation added later must mask the tail explicitly.
        out_ref[...] = jnp.concatenate([prob_t, nll_m, nll_a, w_t], axis=0)

    return kernel


def _pixel_stats(pred, pred_aux, target, weight, ignore_index, hw_tile=None):
    """Runs the Pallas kernel; returns flat (N,) per-pixel stats (f32)."""
    b, c, h, w = pred.shape
    hw = h * w
    n = b * hw

    # Lane-dense spatial tile: multiple of 128, 8192 lanes by default.  Two
    # double-buffered (C, 8192) f32 logit tiles are ~8-9 MiB (half for bf16),
    # comfortably inside v5e/v6e/v7x scoped-VMEM budgets, and large enough to
    # amortize the ~0.35 us per-grid-step overhead even at v7x HBM bandwidth.
    if hw_tile is None:
        hw_tile = 8192
    hw_tile = max(128, min(_round_up(hw_tile, 128), _round_up(hw, 128)))

    # No jnp.pad: a ragged last block is handled by Pallas (masked writeback).
    n_tiles = pl.cdiv(hw, hw_tile)

    pred3 = pred.reshape(b, c, hw)                   # keep caller dtype (bf16 ok)
    aux3 = pred_aux.reshape(b, c, hw)
    tgt3 = target.astype(jnp.int32).reshape(b, 1, hw)
    w2 = jnp.asarray(weight, jnp.float32).reshape(c, 1)

    logit_spec = pl.BlockSpec((None, c, hw_tile), lambda bi, ti: (bi, 0, ti))
    tgt_spec = pl.BlockSpec((None, 1, hw_tile), lambda bi, ti: (bi, 0, ti))
    out_spec = pl.BlockSpec((None, 4, hw_tile), lambda bi, ti: (bi, 0, ti))
    w_spec = pl.BlockSpec((c, 1), lambda bi, ti: (0, 0))

    # TODO(synk): on v7x, verify the (batch, tile) grid shards across both
    # TensorCores; if a profile shows one TC idle, switch an axis to
    # pltpu.CORE_PARALLEL.
    stats = pl.pallas_call(
        _make_pixel_kernel(ignore_index),
        out_shape=jax.ShapeDtypeStruct((b, 4, hw), jnp.float32),
        grid=(b, n_tiles),
        in_specs=[logit_spec, logit_spec, tgt_spec, w_spec],
        out_specs=out_spec,
        compiler_params=pltpu.CompilerParams(
            dimension_semantics=("parallel", "parallel"),
            vmem_limit_bytes=32 * 1024 * 1024,
        ),
    )(pred3, aux3, tgt3, w2)

    prob = stats[:, 0, :].reshape(n)
    nll_m = stats[:, 1, :].reshape(n)
    nll_a = stats[:, 2, :].reshape(n)
    w_t = stats[:, 3, :].reshape(n)
    return prob, nll_m, nll_a, w_t


# --------------------------------------------------------------------------- #
# Exact k-th smallest without a global sort                                    #
# --------------------------------------------------------------------------- #
def _kth_smallest_nonneg(x, k, num_iters=32):
    """Exact value of the k-th smallest (1-indexed) element of a non-negative
    float vector.

    Bisects on the IEEE-754 bit pattern (order-isomorphic to the value for
    non-negative floats): ~32 O(N) counting passes (compare + sum, fully
    vectorized, no scatter) instead of the O(N log N) global sort the PyTorch
    module uses.  Bit-identical result to jnp.sort(x)[k - 1].
    """
    bits = jax.lax.bitcast_convert_type(x.astype(jnp.float32), jnp.int32)
    lo0 = jnp.int32(0)          # x >= 0  ->  bit pattern >= 0
    hi0 = jnp.max(bits)         # #(bits <= hi0) == N >= k

    def body(_, carry):
        lo, hi = carry
        mid = lo + (hi - lo) // 2
        cnt = jnp.sum((bits <= mid).astype(jnp.int32))
        keep_low = cnt >= k
        return jnp.where(keep_low, lo, mid + 1), jnp.where(keep_low, mid, hi)

    _, hi = jax.lax.fori_loop(0, num_iters, body, (lo0, hi0))
    return jax.lax.bitcast_convert_type(hi, jnp.float32)


# --------------------------------------------------------------------------- #
# Full forward (OHEM selection + weighted-mean CE) on top of the kernel        #
# --------------------------------------------------------------------------- #
def prob_ohem_cross_entropy_2d(pred, pred_aux, target, weight, *,
                               thresh=0.7, min_kept=50000, ignore_index=-1,
                               aux_weight=0.4, hw_tile=None):
    b, c, h, w = pred.shape
    assert pred_aux.shape == pred.shape
    assert weight.shape[0] == c, "num classes must match the class-weight vector"
    n = b * h * w

    prob, nll_m, nll_a, w_t = _pixel_stats(
        pred, pred_aux, target, weight, ignore_index, hw_tile)

    tflat = target.reshape(n)
    valid = tflat != ignore_index
    num_valid = jnp.sum(valid)

    if min_kept > 0:
        # Exact min_kept-th smallest prob without an O(N log N) global sort.
        k = min(n, int(min_kept))
        thr_cand = _kth_smallest_nonneg(prob, k)
        threshold = jnp.maximum(jnp.float32(thresh), thr_cand)
    else:
        threshold = jnp.float32(thresh)

    kept = prob <= threshold
    # PyTorch applies OHEM filtering only when num_valid > 0 and min_kept <= num_valid.
    # TODO(synk): the host-side `print('Labels: ...')` in the min_kept > num_valid
    # branch is a side effect with no device equivalent and is omitted.
    do_ohem = (num_valid > 0) & (num_valid >= min_kept)
    final_valid = valid & jnp.where(do_ohem, kept, True)

    # Weighted CrossEntropyLoss, reduction='mean', ignore_index handling.
    # NOTE: like torch.nn.CrossEntropyLoss, this is NaN if every pixel is ignored.
    w_eff = jnp.where(final_valid, w_t, 0.0)
    w_sum = jnp.sum(w_eff)
    loss_main = jnp.sum(w_eff * nll_m) / w_sum
    loss_aux = jnp.sum(w_eff * nll_a) / w_sum
    return loss_main + aux_weight * loss_aux


class ProbOhemCrossEntropy2d:
    """JAX/Pallas equivalent of the PyTorch `ProbOhemCrossEntropy2d` module."""

    _CLASS_WEIGHT = (
        0.9752, 1.1304, 1.0394, 0.979, 1.1678, 0.9746, 0.9684, 0.9843, 1.0779,
        1.0104, 0.8645, 0.9524, 0.9868, 0.9177, 0.8935, 0.9964, 0.9434, 0.9809,
        1.1404, 0.9986, 1.1305, 1.013, 0.9012, 1.004, 0.9556, 0.9, 1.0835,
        1.1341, 0.8632, 0.8645, 0.9675, 1.1404, 1.1137, 0.9552, 0.9701, 1.4059,
        0.8564, 1.1347, 1.0534, 0.9957, 0.9114, 1.0241, 0.9884, 1.0245, 1.0236,
        1.108, 0.8488, 1.0122, 0.9343, 0.9747, 1.0404, 0.9482, 0.8689, 1.1267,
        0.9776, 0.864, 0.903, 0.9728, 1.0239)

    def __init__(self, se_loss=False, se_weight=0.2, nclass=-1, aux=False,
                 aux_weight=0.4, weight=None, size_average=True,
                 ignore_index=-1, reduction='mean', thresh=0.7, min_kept=50000):
        del se_loss, se_weight, nclass, aux, weight, size_average  # unused in forward
        assert reduction == 'mean', "only reduction='mean' is implemented"
        self.ignore_index = ignore_index
        self.aux_weight = aux_weight
        self.thresh = float(thresh)
        self.min_kept = int(min_kept)
        # The torch module hard-codes this 59-class weight vector.
        self.weight = jnp.asarray(self._CLASS_WEIGHT, jnp.float32)

    def __call__(self, pred, pred_aux, target):
        return prob_ohem_cross_entropy_2d(
            pred, pred_aux, target, self.weight,
            thresh=self.thresh, min_kept=self.min_kept,
            ignore_index=self.ignore_index, aux_weight=self.aux_weight)


# --------------------------------------------------------------------------- #
# Pure-JAX references (for correctness checks only)                            #
# --------------------------------------------------------------------------- #
def _reference_pixel_stats(pred, pred_aux, target, weight, ignore_index):
    b, c, h, w = pred.shape
    n = b * h * w
    tflat = target.reshape(n)
    valid = tflat != ignore_index
    tclamp = jnp.where(valid, tflat, 0)
    lg = jnp.transpose(pred.astype(jnp.float32), (1, 0, 2, 3)).reshape(c, n)
    lga = jnp.transpose(pred_aux.astype(jnp.float32), (1, 0, 2, 3)).reshape(c, n)
    idx = jnp.arange(n)
    nll_m = jax.scipy.special.logsumexp(lg, axis=0) - lg[tclamp, idx]
    nll_a = jax.scipy.special.logsumexp(lga, axis=0) - lga[tclamp, idx]
    prob = jnp.where(valid, jnp.exp(-nll_m), 1.0)
    w_t = weight[tclamp]
    return prob, nll_m, nll_a, w_t


def _reference_loss(pred, pred_aux, target, weight, *, thresh, min_kept,
                    ignore_index, aux_weight):
    b, c, h, w = pred.shape
    n = b * h * w
    tflat = target.reshape(n)
    valid = tflat != ignore_index
    num_valid = jnp.sum(valid)
    prob, nll_m, nll_a, w_t = _reference_pixel_stats(
        pred, pred_aux, target, weight, ignore_index)

    if min_kept > 0:
        k = min(n, int(min_kept)) - 1
        threshold = jnp.maximum(jnp.float32(thresh), jnp.sort(prob)[k])
    else:
        threshold = jnp.float32(thresh)
    kept = prob <= threshold
    do_ohem = (num_valid > 0) & (num_valid >= min_kept)
    final_valid = valid & jnp.where(do_ohem, kept, True)

    w_eff = jnp.where(final_valid, w_t, 0.0)
    w_sum = jnp.sum(w_eff)
    return (jnp.sum(w_eff * nll_m) / w_sum
            + aux_weight * (jnp.sum(w_eff * nll_a) / w_sum))


if __name__ == "__main__":
    key = jax.random.PRNGKey(0)
    k1, k2, k3, k4 = jax.random.split(key, 4)

    C = len(ProbOhemCrossEntropy2d._CLASS_WEIGHT)   # 59 classes (hard-coded weights)
    B, H, W = 2, 16, 16
    pred = jax.random.normal(k1, (B, C, H, W), jnp.float32)
    pred_aux = jax.random.normal(k2, (B, C, H, W), jnp.float32)
    target = jax.random.randint(k3, (B, H, W), 0, C, dtype=jnp.int32)
    target = jnp.where(jax.random.uniform(k4, (B, H, W)) < 0.1, -1, target)

    # Default module: min_kept (50000) > num_valid, so OHEM filtering is skipped.
    mod = ProbOhemCrossEntropy2d()
    loss = jax.block_until_ready(mod(pred, pred_aux, target))

    # Smaller min_kept / thresh so the OHEM hard-example path is exercised.
    mod_ohem = ProbOhemCrossEntropy2d(thresh=0.05, min_kept=100)
    loss_ohem = jax.block_until_ready(mod_ohem(pred, pred_aux, target))

    # ---- correctness: kernel pixel stats vs pure-JAX reference ----
    got = _pixel_stats(pred, pred_aux, target, mod.weight, -1)
    ref = _reference_pixel_stats(pred, pred_aux, target, mod.weight, -1)
    for g, r in zip(got, ref):
        assert float(jnp.max(jnp.abs(g - r))) < 1e-4

    # ---- ragged spatial extent (hw not a multiple of the tile): no-pad path ----
    Hr, Wr = 13, 19
    pred_r = jax.random.normal(k1, (B, C, Hr, Wr), jnp.float32)
    aux_r = jax.random.normal(k2, (B, C, Hr, Wr), jnp.float32)
    tgt_r = jax.random.randint(k3, (B, Hr, Wr), 0, C, dtype=jnp.int32)
    got_r = _pixel_stats(pred_r, aux_r, tgt_r, mod.weight, -1)
    ref_r = _reference_pixel_stats(pred_r, aux_r, tgt_r, mod.weight, -1)
    for g, r in zip(got_r, ref_r):
        assert float(jnp.max(jnp.abs(g - r))) < 1e-4

    # ---- exact k-th smallest (bit-bisection) vs jnp.sort ----
    prob_vec = got[0]
    for kk in (1, 7, 100, int(prob_vec.shape[0])):
        assert float(_kth_smallest_nonneg(prob_vec, kk)) == float(jnp.sort(prob_vec)[kk - 1])

    # ---- full loss vs pure-JAX reference ----
    ref_loss = _reference_loss(pred, pred_aux, target, mod.weight,
                               thresh=0.7, min_kept=50000,
                               ignore_index=-1, aux_weight=0.4)
    ref_loss_ohem = _reference_loss(pred, pred_aux, target, mod.weight,
                                    thresh=0.05, min_kept=100,
                                    ignore_index=-1, aux_weight=0.4)
    assert bool(jnp.isfinite(loss)) and bool(jnp.isfinite(loss_ohem))
    assert abs(float(loss) - float(ref_loss)) < 1e-4 * max(1.0, abs(float(ref_loss)))
    assert abs(float(loss_ohem) - float(ref_loss_ohem)) < 1e-3 * max(1.0, abs(float(ref_loss_ohem)))

    # ---- bf16 logits end-to-end (halves HBM read traffic; math stays f32) ----
    pred_bf = pred.astype(jnp.bfloat16)
    aux_bf = pred_aux.astype(jnp.bfloat16)
    loss_bf16 = jax.block_until_ready(mod(pred_bf, aux_bf, target))
    ref_loss_bf16 = _reference_loss(pred_bf, aux_bf, target, mod.weight,
                                    thresh=0.7, min_kept=50000,
                                    ignore_index=-1, aux_weight=0.4)
    assert bool(jnp.isfinite(loss_bf16))
    assert abs(float(loss_bf16) - float(ref_loss_bf16)) < 1e-3 * max(1.0, abs(float(ref_loss_bf16)))

    print("KERNEL_OK")
</pallas_src>

<mosaic_0001>
module attributes {stable_mosaic.version = 11 : i64} {
  func.func @kernel(%arg0: i32, %arg1: i32, %arg2: memref<1x59x256xf32, #tpu.memory_space<vmem>>, %arg3: memref<1x59x256xf32, #tpu.memory_space<vmem>>, %arg4: memref<1x1x256xi32, #tpu.memory_space<vmem>>, %arg5: memref<59x1xf32, #tpu.memory_space<vmem>>, %arg6: memref<1x4x256xf32, #tpu.memory_space<vmem>>) attributes {dimension_semantics = [#tpu.dimension_semantics<parallel>, #tpu.dimension_semantics<parallel>], iteration_bounds = array<i64: 2, 1>, scalar_prefetch = 0 : i64, scratch_operands = 0 : i64, tpu.core_type = #tpu.core_type<tc>, window_params = [{transform_indices = @transform_0, window_bounds = array<i64: 1, 59, 256>}, {transform_indices = @transform_1, window_bounds = array<i64: 1, 59, 256>}, {transform_indices = @transform_2, window_bounds = array<i64: 1, 1, 256>}, {pipeline_mode = #tpu.pipeline_mode<synchronous>, transform_indices = @transform_3, window_bounds = array<i64: 59, 1>}, {transform_indices = @transform_4, window_bounds = array<i64: 1, 4, 256>}]} {
    %c0 = arith.constant 0 : index
    %c0_0 = arith.constant 0 : index
    %c0_1 = arith.constant 0 : index
    %0 = vector.load %arg2[%c0, %c0_0, %c0_1] : memref<1x59x256xf32, #tpu.memory_space<vmem>>, vector<1x59x256xf32>
    %1 = vector.shape_cast %0 : vector<1x59x256xf32> to vector<59x256xf32>
    %c0_2 = arith.constant 0 : index
    %c0_3 = arith.constant 0 : index
    %c0_4 = arith.constant 0 : index
    %2 = vector.load %arg3[%c0_2, %c0_3, %c0_4] : memref<1x59x256xf32, #tpu.memory_space<vmem>>, vector<1x59x256xf32>
    %3 = vector.shape_cast %2 : vector<1x59x256xf32> to vector<59x256xf32>
    %c0_5 = arith.constant 0 : index
    %c0_6 = arith.constant 0 : index
    %c0_7 = arith.constant 0 : index
    %4 = vector.load %arg4[%c0_5, %c0_6, %c0_7] : memref<1x1x256xi32, #tpu.memory_space<vmem>>, vector<1x1x256xi32>
    %5 = vector.shape_cast %4 : vector<1x1x256xi32> to vector<1x256xi32>
    %c0_8 = arith.constant 0 : index
    %c0_9 = arith.constant 0 : index
    %6 = vector.load %arg5[%c0_8, %c0_9] : memref<59x1xf32, #tpu.memory_space<vmem>>, vector<59x1xf32>
    %c-1_i32 = arith.constant -1 : i32
    %7 = vector.broadcast %c-1_i32 : i32 to vector<1x256xi32>
    %8 = arith.cmpi ne, %5, %7 : vector<1x256xi32>
    %c0_i32 = arith.constant 0 : i32
    %9 = vector.broadcast %c0_i32 : i32 to vector<1x256xi32>
    %10 = arith.select %8, %5, %9 : vector<1x256xi1>, vector<1x256xi32>
    %11 = tpu.iota {dimensions = array<i32: 0>} : vector<59x256xi32>
    %12 = vector.broadcast %10 : vector<1x256xi32> to vector<59x256xi32>
    %13 = arith.cmpi eq, %11, %12 : vector<59x256xi32>
    %14 = arith.extui %13 : vector<59x256xi1> to vector<59x256xi32>
    %15 = arith.sitofp %14 : vector<59x256xi32> to vector<59x256xf32>
    %cst = arith.constant dense<0xFF800000> : vector<256xf32>
    %16 = vector.multi_reduction <maximumf>, %1, %cst [0] : vector<59x256xf32> to vector<256xf32>
    %17 = vector.shape_cast %16 : vector<256xf32> to vector<1x256xf32>
    %18 = vector.broadcast %17 : vector<1x256xf32> to vector<59x256xf32>
    %19 = arith.subf %1, %18 : vector<59x256xf32>
    %20 = math.exp %19 : vector<59x256xf32>
    %cst_10 = arith.constant dense<0.000000e+00> : vector<256xf32>
    %21 = vector.multi_reduction <add>, %20, %cst_10 [0] : vector<59x256xf32> to vector<256xf32>
    %22 = vector.shape_cast %21 : vector<256xf32> to vector<1x256xf32>
    %23 = math.log %22 : vector<1x256xf32>
    %24 = arith.addf %17, %23 : vector<1x256xf32>
    %25 = arith.mulf %1, %15 : vector<59x256xf32>
    %cst_11 = arith.constant dense<0.000000e+00> : vector<256xf32>
    %26 = vector.multi_reduction <add>, %25, %cst_11 [0] : vector<59x256xf32> to vector<256xf32>
    %27 = vector.shape_cast %26 : vector<256xf32> to vector<1x256xf32>
    %28 = arith.subf %24, %27 : vector<1x256xf32>
    %cst_12 = arith.constant dense<0xFF800000> : vector<256xf32>
    %29 = vector.multi_reduction <maximumf>, %3, %cst_12 [0] : vector<59x256xf32> to vector<256xf32>
    %30 = vector.shape_cast %29 : vector<256xf32> to vector<1x256xf32>
    %31 = vector.broadcast %30 : vector<1x256xf32> to vector<59x256xf32>
    %32 = arith.subf %3, %31 : vector<59x256xf32>
    %33 = math.exp %32 : vector<59x256xf32>
    %cst_13 = arith.constant dense<0.000000e+00> : vector<256xf32>
    %34 = vector.multi_reduction <add>, %33, %cst_13 [0] : vector<59x256xf32> to vector<256xf32>
    %35 = vector.shape_cast %34 : vector<256xf32> to vector<1x256xf32>
    %36 = math.log %35 : vector<1x256xf32>
    %37 = arith.addf %30, %36 : vector<1x256xf32>
    %38 = arith.mulf %3, %15 : vector<59x256xf32>
    %cst_14 = arith.constant dense<0.000000e+00> : vector<256xf32>
    %39 = vector.multi_reduction <add>, %38, %cst_14 [0] : vector<59x256xf32> to vector<256xf32>
    %40 = vector.shape_cast %39 : vector<256xf32> to vector<1x256xf32>
    %41 = arith.subf %37, %40 : vector<1x256xf32>
    %cst_15 = arith.constant 0.000000e+00 : f32
    %42 = vector.broadcast %cst_15 : f32 to vector<1x256xf32>
    %43 = arith.subf %42, %28 : vector<1x256xf32>
    %44 = math.exp %43 : vector<1x256xf32>
    %cst_16 = arith.constant 1.000000e+00 : f32
    %45 = vector.broadcast %cst_16 : f32 to vector<1x256xf32>
    %46 = arith.select %8, %44, %45 : vector<1x256xi1>, vector<1x256xf32>
    %47 = vector.broadcast %6 : vector<59x1xf32> to vector<59x256xf32>
    %48 = arith.mulf %47, %15 : vector<59x256xf32>
    %cst_17 = arith.constant dense<0.000000e+00> : vector<256xf32>
    %49 = vector.multi_reduction <add>, %48, %cst_17 [0] : vector<59x256xf32> to vector<256xf32>
    %50 = vector.shape_cast %49 : vector<256xf32> to vector<1x256xf32>
    %51 = tpu.concatenate %46, %28, %41, %50 in 0 : vector<1x256xf32>, vector<1x256xf32>, vector<1x256xf32>, vector<1x256xf32> -> vector<4x256xf32>
    %c0_18 = arith.constant 0 : index
    %c0_19 = arith.constant 0 : index
    %c0_20 = arith.constant 0 : index
    %52 = vector.load %arg6[%c0_18, %c0_19, %c0_20] : memref<1x4x256xf32, #tpu.memory_space<vmem>>, vector<1x4x256xf32>
    %53 = vector.shape_cast %52 : vector<1x4x256xf32> to vector<4x256xf32>
    %54 = vector.shape_cast %51 : vector<4x256xf32> to vector<1x4x256xf32>
    tpu.vector_store %arg6[%c0_18, %c0_19, %c0_20], %54 {strides = array<i32>} : memref<1x4x256xf32, #tpu.memory_space<vmem>>, vector<1x4x256xf32>,
    return
  }
  func.func @transform_0(%arg0: i32, %arg1: i32) -> (i32, i32, i32) {
    %c0_i32 = arith.constant 0 : i32
    %c0_i32_0 = arith.constant 0 : i32
    return %arg0, %c0_i32, %arg1 : i32, i32, i32
  }
  func.func @transform_1(%arg0: i32, %arg1: i32) -> (i32, i32, i32) {
    %c0_i32 = arith.constant 0 : i32
    %c0_i32_0 = arith.constant 0 : i32
    return %arg0, %c0_i32, %arg1 : i32, i32, i32
  }
  func.func @transform_2(%arg0: i32, %arg1: i32) -> (i32, i32, i32) {
    %c0_i32 = arith.constant 0 : i32
    %c0_i32_0 = arith.constant 0 : i32
    return %arg0, %c0_i32, %arg1 : i32, i32, i32
  }
  func.func @transform_3(%arg0: i32, %arg1: i32) -> (i32, i32) {
    %c0_i32 = arith.constant 0 : i32
    %c0_i32_0 = arith.constant 0 : i32
    %c0_i32_1 = arith.constant 0 : i32
    return %c0_i32, %c0_i32_0 : i32, i32
  }
  func.func @transform_4(%arg0: i32, %arg1: i32) -> (i32, i32, i32) {
    %c0_i32 = arith.constant 0 : i32
    %c0_i32_0 = arith.constant 0 : i32
    return %arg0, %c0_i32, %arg1 : i32, i32, i32
  }
}

</mosaic_0001>

<llo_original>
// kernel: tpu_custom_call.1
$region0: #{tpu_custom_call.1}
  #allocation0 [shape = 'u32[]', space=smem, size = 0x4, offset = 0x4, fixed_abs, tag = 'smem constant byte address 0x4 - core index']
  #allocation1 [shape = 'u32[72,128]{1,0:T(1,128)}', space=vmem, size = 0x9000, scoped, tag = 'internal scratch']
  %s0 = inlined_call_operand.vmem [shape: f32[2,59,256], index: 0, kind: input, shape index: {}]
  %s1 = inlined_call_operand.vmem [shape: f32[2,59,256], index: 1, kind: input, shape index: {}]
  %s2 = inlined_call_operand.vmem [shape: s32[2,1,256], index: 2, kind: input, shape index: {}]
  %s3 = inlined_call_operand.vmem [shape: f32[59,1], index: 3, kind: input, shape index: {}]
  %s4 = inlined_call_operand.hbm [shape: f32[2,4,256], index: 4, kind: output, shape index: {}]
  %s5 = sld [smem:[#allocation0]]
  $region49: #{tpu_custom_call.1} parent=0
    _
  %s7 = ssub.s32 1, %s5
  %s8 = scalar_select 0, %s7, %s5
  $region1: #{tpu_custom_call.1} parent=0
    #allocation2 [shape = 'u8[8192]{0}', space=vmem, size = 0x2000, scoped, tag = 'output window, operand 0']
    #allocation3 [shape = 's32[2]{0}', space=sflag, size = 0x8, scoped, tag = 'scoped memory for tpu_custom_call.1']
    %9 = vsyncpa [#allocation3], 0
    %s10 = scalar_lea.sflag [#allocation3], 1
    %11 = vsyncpa %s10, 0
    loop: start=0, step=1, limit=4
    $region2: #{tpu_custom_call.1} parent=1 // loop_pre_header
      _
    $region3: #{tpu_custom_call.1} parent=1 // loop_header
      %s13 = sphi 0, %s17
      %p14 = scmp.ge.s32.totalorder %s13, 4
      %s20 = sphi 0, %s32
      %s21 = sphi 0, %s28
      %s22 = sphi 0, %s20
      %s23 = sphi 0, %s21
      %s24 = sphi 0, %s22
      %s25 = sphi 0, %s23
      %s37 = sphi 0, %s39
      %s40 = sphi 0, %s37
      %s41 = sphi 0, %s40
      %s57 = sphi 0, %s41
      %s65 = sphi 0, %s67
      %s68 = sphi 0, %s65
      %s69 = sphi 0, %s68
      %s85 = sphi 0, %s69
      %s93 = sphi 0, %s95
      %s96 = sphi 0, %s93
      %s97 = sphi 0, %s96
      %s113 = sphi 0, %s97
      %s117 = sphi 0, %s117
      %s119 = sphi 0, %s117
      %s120 = sphi 0, %s119
      %s134 = sphi 0, %s120
      %s142 = sphi 0, %s144
      %s145 = sphi 0, %s142
      %s146 = sphi 0, %s145
      %s162 = sphi 0, %s146
    $region4: #{tpu_custom_call.1} parent=1 // loop_header_branch
      %16 = sbr.rel (%p14) target = $region8
    $region5: #{tpu_custom_call.1} parent=1 // loop_body
      %s18 = ssub.s32 %s13, 1
      %s19 = ssub.s32 %s13, 2
      %s26 = sadd.s32 1, %s21
      %p27 = scmp.ge.s32.totalorder %s26, 1
      %s28 = scalar_select %p27, 0, %s26
      %s29 = sadd.s32 1, %s20
      %s30 = scalar_select %p27, %s29, %s20
      %p31 = scmp.ge.s32.totalorder %s30, 2
      %s32 = scalar_select %p31, 0, %s30
      %s33 = ssub.s32 %s20, %s32
      %s34 = ssub.s32 %s21, %s28
      %s35 = sor.u32 %s33, %s34
      %p36 = scmp.eq.s32.totalorder %s35, 0
      %s38 = sadd.s32 %s37, 1
      %s39 = scalar_select %p36, %s37, %s38
      %p42 = pneg %p36
      %p43 = scmp.eq.s32.totalorder %s13, 1
      %p44 = por %p42, %p43
      %p45 = scmp.ne.s32.totalorder %s37, %s40
      %p46 = scmp.eq.s32.totalorder %s13, 0
      %p47 = por %p45, %p46
      %p48 = scmp.ne.s32.totalorder %s37, %s40
      %p49 = scmp.eq.s32.totalorder %s18, 1
      %p50 = por %p48, %p49
      %p51 = scmp.ne.s32.totalorder %s40, %s41
      %p52 = scmp.eq.s32.totalorder %s18, 0
      %p53 = por %p51, %p52
      %p54 = scmp.ne.s32.totalorder %s40, %s41
      %p55 = scmp.eq.s32.totalorder %s19, 1
      %p56 = por %p54, %p55
      %p58 = scmp.ne.s32.totalorder %s41, %s57
      %p59 = scmp.eq.s32.totalorder %s19, 0
      %p60 = por %p58, %p59
      %s61 = ssub.s32 %s20, %s32
      %s62 = ssub.s32 %s21, %s28
      %s63 = sor.u32 %s61, %s62
      %p64 = scmp.eq.s32.totalorder %s63, 0
      %s66 = sadd.s32 %s65, 1
      %s67 = scalar_select %p64, %s65, %s66
      %p70 = pneg %p64
      %p71 = scmp.eq.s32.totalorder %s13, 1
      %p72 = por %p70, %p71
      %p73 = scmp.ne.s32.totalorder %s65, %s68
      %p74 = scmp.eq.s32.totalorder %s13, 0
      %p75 = por %p73, %p74
      %p76 = scmp.ne.s32.totalorder %s65, %s68
      %p77 = scmp.eq.s32.totalorder %s18, 1
      %p78 = por %p76, %p77
      %p79 = scmp.ne.s32.totalorder %s68, %s69
      %p80 = scmp.eq.s32.totalorder %s18, 0
      %p81 = por %p79, %p80
      %p82 = scmp.ne.s32.totalorder %s68, %s69
      %p83 = scmp.eq.s32.totalorder %s19, 1
      %p84 = por %p82, %p83
      %p86 = scmp.ne.s32.totalorder %s69, %s85
      %p87 = scmp.eq.s32.totalorder %s19, 0
      %p88 = por %p86, %p87
      %s89 = ssub.s32 %s20, %s32
      %s90 = ssub.s32 %s21, %s28
      %s91 = sor.u32 %s89, %s90
      %p92 = scmp.eq.s32.totalorder %s91, 0
      %s94 = sadd.s32 %s93, 1
      %s95 = scalar_select %p92, %s93, %s94
      %p98 = pneg %p92
      %p99 = scmp.eq.s32.totalorder %s13, 1
      %p100 = por %p98, %p99
      %p101 = scmp.ne.s32.totalorder %s93, %s96
      %p102 = scmp.eq.s32.totalorder %s13, 0
      %p103 = por %p101, %p102
      %p104 = scmp.ne.s32.totalorder %s93, %s96
      %p105 = scmp.eq.s32.totalorder %s18, 1
      %p106 = por %p104, %p105
      %p107 = scmp.ne.s32.totalorder %s96, %s97
      %p108 = scmp.eq.s32.totalorder %s18, 0
      %p109 = por %p107, %p108
      %p110 = scmp.ne.s32.totalorder %s96, %s97
      %p111 = scmp.eq.s32.totalorder %s19, 1
      %p112 = por %p110, %p111
      %p114 = scmp.ne.s32.totalorder %s97, %s113
      %p115 = scmp.eq.s32.totalorder %s19, 0
      %p116 = por %p114, %p115
      %s118 = sadd.s32 %s117, 1
      %p121 = scmp.eq.s32.totalorder %s13, 1
      %p122 = scmp.ne.s32.totalorder %s117, %s119
      %p123 = scmp.eq.s32.totalorder %s13, 0
      %p124 = por %p122, %p123
      %p125 = scmp.ne.s32.totalorder %s117, %s119
      %p126 = scmp.eq.s32.totalorder %s18, 1
      %p127 = por %p125, %p126
      %p128 = scmp.ne.s32.totalorder %s119, %s120
      %p129 = scmp.eq.s32.totalorder %s18, 0
      %p130 = por %p128, %p129
      %p131 = scmp.ne.s32.totalorder %s119, %s120
      %p132 = scmp.eq.s32.totalorder %s19, 1
      %p133 = por %p131, %p132
      %p135 = scmp.ne.s32.totalorder %s120, %s134
      %p136 = scmp.eq.s32.totalorder %s19, 0
      %p137 = por %p135, %p136
      %s138 = ssub.s32 %s20, %s32
      %s139 = ssub.s32 %s21, %s28
      %s140 = sor.u32 %s138, %s139
      %p141 = scmp.eq.s32.totalorder %s140, 0
      %s143 = sadd.s32 %s142, 1
      %s144 = scalar_select %p141, %s142, %s143
      %p147 = pneg %p141
      %p148 = scmp.eq.s32.totalorder %s13, 1
      %p149 = por %p147, %p148
      %p150 = scmp.ne.s32.totalorder %s142, %s145
      %p151 = scmp.eq.s32.totalorder %s13, 0
      %p152 = por %p150, %p151
      %p153 = scmp.ne.s32.totalorder %s142, %s145
      %p154 = scmp.eq.s32.totalorder %s18, 1
      %p155 = por %p153, %p154
      %p156 = scmp.ne.s32.totalorder %s145, %s146
      %p157 = scmp.eq.s32.totalorder %s18, 0
      %p158 = por %p156, %p157
      %p159 = scmp.ne.s32.totalorder %s145, %s146
      %p160 = scmp.eq.s32.totalorder %s19, 1
      %p161 = por %p159, %p160
      %p163 = scmp.ne.s32.totalorder %s146, %s162
      %p164 = scmp.eq.s32.totalorder %s19, 0
      %p165 = por %p163, %p164
      %p166 = scmp.le.s32.totalorder 1, %s13
      %p167 = scmp.lt.s32.totalorder %s13, 3
      %p168 = pnand %p166, %p167
      %p169 = pneg %p168
      // Predicated region
      $region9: #{tpu_custom_call.1} parent=5 // pred_check
        _
      $region10: #{tpu_custom_call.1} parent=5 // pred_check_branch
        %171 = sbr.rel (%p168) target = $region12
      $region11: #{tpu_custom_call.1} parent=5 // pred_region
        %s172 = ssub.s32 %s13, 1
        // Predicated region
        $region13: #{tpu_custom_call.1} parent=11 // pred_check
          %p173 = pneg %p130
        $region14: #{tpu_custom_call.1} parent=11 // pred_check_branch
          %175 = sbr.rel (%p173) target = $region16
        $region15: #{tpu_custom_call.1} parent=11 // pred_region
          _
        $region16: #{tpu_custom_call.1} parent=11 // pred_fallthru
          _
      $region12: #{tpu_custom_call.1} parent=5 // pred_fallthru
        _
      %p176 = scmp.lt.s32.totalorder %s13, 2
      // Predicated region
      $region17: #{tpu_custom_call.1} parent=5 // pred_check
        %p177 = pneg %p176
      $region18: #{tpu_custom_call.1} parent=5 // pred_check_branch
        %179 = sbr.rel (%p177) target = $region20
      $region19: #{tpu_custom_call.1} parent=5 // pred_region
        // Predicated region
        $region21: #{tpu_custom_call.1} parent=19 // pred_check
          %p180 = pneg %p47
        $region22: #{tpu_custom_call.1} parent=19 // pred_check_branch
          %182 = sbr.rel (%p180) target = $region24
        $region23: #{tpu_custom_call.1} parent=19 // pred_region
          %s183 = smul.u32 2, %s21
          %p184 = scmp.lt.s32.totalorder %s20, 1
          %s185 = scalar_select %p184, %s20, 1
          %p186 = scmp.lt.s32.totalorder %s183, 1
          %s187 = scalar_select %p186, %s183, 1
          %s188 = smul.addr %s185, 16
          %s189 = sadd.s32 %s187, %s188
          %s190 = smul.addr %s189, 8
          %s191 = scalar_lea.vmem %s0, %s190
          %s192 = smul.u32 2, %s21
        $region24: #{tpu_custom_call.1} parent=19 // pred_fallthru
          _
        // Predicated region
        $region25: #{tpu_custom_call.1} parent=19 // pred_check
          %p193 = pneg %p75
        $region26: #{tpu_custom_call.1} parent=19 // pred_check_branch
          %195 = sbr.rel (%p193) target = $region28
        $region27: #{tpu_custom_call.1} parent=19 // pred_region
          %s196 = smul.u32 2, %s21
          %p197 = scmp.lt.s32.totalorder %s20, 1
          %s198 = scalar_select %p197, %s20, 1
          %p199 = scmp.lt.s32.totalorder %s196, 1
          %s200 = scalar_select %p199, %s196, 1
          %s201 = smul.addr %s198, 16
          %s202 = sadd.s32 %s200, %s201
          %s203 = smul.addr %s202, 8
          %s204 = scalar_lea.vmem %s1, %s203
          %s205 = smul.u32 2, %s21
        $region28: #{tpu_custom_call.1} parent=19 // pred_fallthru
          _
        // Predicated region
        $region29: #{tpu_custom_call.1} parent=19 // pred_check
          %p206 = pneg %p103
        $region30: #{tpu_custom_call.1} parent=19 // pred_check_branch
          %208 = sbr.rel (%p206) target = $region32
        $region31: #{tpu_custom_call.1} parent=19 // pred_region
          %s209 = smul.u32 2, %s21
          %p210 = scmp.lt.s32.totalorder %s20, 1
          %s211 = scalar_select %p210, %s20, 1
          %p212 = scmp.lt.s32.totalorder %s209, 1
          %s213 = scalar_select %p212, %s209, 1
          %s214 = smul.addr %s211, 2
          %s215 = sadd.s32 %s213, %s214
          %s216 = scalar_lea.vmem %s2, %s215
          %s217 = smul.u32 2, %s21
        $region32: #{tpu_custom_call.1} parent=19 // pred_fallthru
          _
      $region20: #{tpu_custom_call.1} parent=5 // pred_fallthru
        _
      %p218 = scmp.le.s32.totalorder 1, %s13
      %p219 = scmp.lt.s32.totalorder %s13, 3
      %p220 = pnand %p218, %p219
      %p221 = pneg %p220
      // Predicated region
      $region33: #{tpu_custom_call.1} parent=5 // pred_check
        _
      $region34: #{tpu_custom_call.1} parent=5 // pred_check_branch
        %223 = sbr.rel (%p220) target = $region36
      $region35: #{tpu_custom_call.1} parent=5 // pred_region
        %s224 = ssub.s32 %s13, 1
        %s225 = smul.u32 2, %s23
        %p226 = scmp.lt.s32.totalorder %s22, 1
        %s227 = scalar_select %p226, %s22, 1
        %p228 = scmp.lt.s32.totalorder %s225, 1
        %s229 = scalar_select %p228, %s225, 1
        %s230 = smul.addr %s227, 16
        %s231 = sadd.s32 %s229, %s230
        %s232 = smul.addr %s231, 8
        %s233 = scalar_lea.vmem %s0, %s232
        %p234 = pneg %p53
        %p235 = pneg %p50
        %s236 = smul.u32 2, %s23
        %p237 = scmp.lt.s32.totalorder %s22, 1
        %s238 = scalar_select %p237, %s22, 1
        %p239 = scmp.lt.s32.totalorder %s236, 1
        %s240 = scalar_select %p239, %s236, 1
        %s241 = smul.addr %s238, 16
        %s242 = sadd.s32 %s240, %s241
        %s243 = smul.addr %s242, 8
        %s244 = scalar_lea.vmem %s1, %s243
        %p245 = pneg %p81
        %p246 = pneg %p78
        %s247 = smul.u32 2, %s23
        %p248 = scmp.lt.s32.totalorder %s22, 1
        %s249 = scalar_select %p248, %s22, 1
        %p250 = scmp.lt.s32.totalorder %s247, 1
        %s251 = scalar_select %p250, %s247, 1
        %s252 = smul.addr %s249, 2
        %s253 = sadd.s32 %s251, %s252
        %s254 = scalar_lea.vmem %s2, %s253
        %p255 = pneg %p109
        %p256 = pneg %p106
        %p257 = pneg %p130
        %p258 = pneg %p127
        %p259 = pneg %p158
        %p260 = pneg %p155
        %s261 = sand.u32 %s145, 1
        %s262 = scalar_lea.sflag [#allocation3], %s261
        %s263 = sand.u32 %s145, 1
        %s264 = smul.addr %s263, 8
        %s265 = scalar_lea.vmem [#allocation2], %s264
        %s266 = smul.u32 2, %s23
        %p267 = scmp.lt.s32.totalorder %s22, 1
        %s268 = scalar_select %p267, %s22, 1
        %p269 = scmp.lt.s32.totalorder %s266, 1
        %s270 = scalar_select %p269, %s266, 1
        %s271 = smul.addr %s268, 16
        %s272 = sadd.s32 %s270, %s271
        %s273 = smul.addr %s272, 8
        %s274 = scalar_lea.vmem %s0, %s273
        %s275 = smul.u32 2, %s23
        %s276 = smul.u32 2, %s23
        %p277 = scmp.lt.s32.totalorder %s22, 1
        %s278 = scalar_select %p277, %s22, 1
        %p279 = scmp.lt.s32.totalorder %s276, 1
        %s280 = scalar_select %p279, %s276, 1
        %s281 = smul.addr %s278, 16
        %s282 = sadd.s32 %s280, %s281
        %s283 = smul.addr %s282, 8
        %s284 = scalar_lea.vmem %s1, %s283
        %s285 = smul.u32 2, %s23
        %s286 = smul.u32 2, %s23
        %p287 = scmp.lt.s32.totalorder %s22, 1
        %s288 = scalar_select %p287, %s22, 1
        %p289 = scmp.lt.s32.totalorder %s286, 1
        %s290 = scalar_select %p289, %s286, 1
        %s291 = smul.addr %s288, 2
        %s292 = sadd.s32 %s290, %s291
        %s293 = scalar_lea.vmem %s2, %s292
        %s294 = smul.u32 2, %s23
        %s295 = smul.u32 2, %s23
        %v296 = vld [vmem:[%s274] sm:$0xff]
        %v297 = vld [vmem:[%s274 + $0x8] sm:$0xff]
        %v298 = vld [vmem:[%s274 + $0x10] sm:$0xff]
        %v299 = vld [vmem:[%s274 + $0x18] sm:$0xff]
        %v300 = vld [vmem:[%s274 + $0x20] sm:$0xff]
        %v301 = vld [vmem:[%s274 + $0x28] sm:$0xff]
        %v302 = vld [vmem:[%s274 + $0x30] sm:$0xff]
        %v303 = vld [vmem:[%s274 + $0x38] sm:$0xff]
        %v304 = vld [vmem:[%s274 + $0x40] sm:$0xff]
        %v305 = vld [vmem:[%s274 + $0x48] sm:$0xff]
        %v306 = vld [vmem:[%s274 + $0x50] sm:$0xff]
        %v307 = vld [vmem:[%s274 + $0x58] sm:$0xff]
        %v308 = vld [vmem:[%s274 + $0x60] sm:$0xff]
        %v309 = vld [vmem:[%s274 + $0x68] sm:$0xff]
        %v310 = vld [vmem:[%s274 + $0x70] sm:$0x7]
        %v311 = vld [vmem:[%s274 + $0x78] sm:$0x7]
        %v312 = vld [vmem:[%s284] sm:$0xff]
        %v313 = vld [vmem:[%s284 + $0x8] sm:$0xff]
        %v314 = vld [vmem:[%s284 + $0x10] sm:$0xff]
        %v315 = vld [vmem:[%s284 + $0x18] sm:$0xff]
        %v316 = vld [vmem:[%s284 + $0x20] sm:$0xff]
        %v317 = vld [vmem:[%s284 + $0x28] sm:$0xff]
        %v318 = vld [vmem:[%s284 + $0x30] sm:$0xff]
        %v319 = vld [vmem:[%s284 + $0x38] sm:$0xff]
        %v320 = vld [vmem:[%s284 + $0x40] sm:$0xff]
        %v321 = vld [vmem:[%s284 + $0x48] sm:$0xff]
        %v322 = vld [vmem:[%s284 + $0x50] sm:$0xff]
        %v323 = vld [vmem:[%s284 + $0x58] sm:$0xff]
        %v324 = vld [vmem:[%s284 + $0x60] sm:$0xff]
        %v325 = vld [vmem:[%s284 + $0x68] sm:$0xff]
        %v326 = vld [vmem:[%s284 + $0x70] sm:$0x7]
        %v327 = vld [vmem:[%s284 + $0x78] sm:$0x7]
        %v328 = vld [vmem:[%s293] sm:$0x3]
        %v329 = vld [vmem:[%s3] sm:$0xff]
        %v330 = vld [vmem:[%s3 + $0x8] sm:$0xff]
        %v331 = vld [vmem:[%s3 + $0x10] sm:$0xff]
        %v332 = vld [vmem:[%s3 + $0x18] sm:$0xff]
        %v333 = vld [vmem:[%s3 + $0x20] sm:$0xff]
        %v334 = vld [vmem:[%s3 + $0x28] sm:$0xff]
        %v335 = vld [vmem:[%s3 + $0x30] sm:$0xff]
        %v336 = vld [vmem:[%s3 + $0x38] sm:$0x7]
        %vm337 = vcmp.ne.s32.totalorder %v328, 4294967295
        %v338 = vsel %vm337, %v328, 0
        %v339 = vlaneseq
        %v340 = vshrl.u32 %v339, 7
        %v341 = vadd.s32 %v340, 8
        %v342 = vadd.s32 %v340, 16
        %v343 = vadd.s32 %v340, 24
        %v344 = vadd.s32 %v340, 32
        %v345 = vadd.s32 %v340, 40
        %v346 = vadd.s32 %v340, 48
        %v347 = vadd.s32 %v340, 56
        %v348 = vperm.slane %v338, 0
        %v349 = vperm.slane %v338, 1
        %vm350 = vcmp.eq.s32.totalorder %v340, %v348
        %vm351 = vcmp.eq.s32.totalorder %v340, %v349
        %vm352 = vcmp.eq.s32.totalorder %v341, %v348
        %vm353 = vcmp.eq.s32.totalorder %v341, %v349
        %vm354 = vcmp.eq.s32.totalorder %v342, %v348
        %vm355 = vcmp.eq.s32.totalorder %v342, %v349
        %vm356 = vcmp.eq.s32.totalorder %v343, %v348
        %vm357 = vcmp.eq.s32.totalorder %v343, %v349
        %vm358 = vcmp.eq.s32.totalorder %v344, %v348
        %vm359 = vcmp.eq.s32.totalorder %v344, %v349
        %vm360 = vcmp.eq.s32.totalorder %v345, %v348
        %vm361 = vcmp.eq.s32.totalorder %v345, %v349
        %vm362 = vcmp.eq.s32.totalorder %v346, %v348
        %vm363 = vcmp.eq.s32.totalorder %v346, %v349
        %vm364 = vcmp.eq.s32.totalorder %v347, %v348
        %vm365 = vcmp.eq.s32.totalorder %v347, %v349
        %v366 = vsel %vm350, 1, 0
        %v367 = vsel %vm351, 1, 0
        %v368 = vsel %vm352, 1, 0
        %v369 = vsel %vm353, 1, 0
        %v370 = vsel %vm354, 1, 0
        %v371 = vsel %vm355, 1, 0
        %v372 = vsel %vm356, 1, 0
        %v373 = vsel %vm357, 1, 0
        %v374 = vsel %vm358, 1, 0
        %v375 = vsel %vm359, 1, 0
        %v376 = vsel %vm360, 1, 0
        %v377 = vsel %vm361, 1, 0
        %v378 = vsel %vm362, 1, 0
        %v379 = vsel %vm363, 1, 0
        %v380 = vsel %vm364, 1, 0
        %v381 = vsel %vm365, 1, 0
        %v382 = vcvt.s32.f32 %v366
        %v383 = vcvt.s32.f32 %v367
        %v384 = vcvt.s32.f32 %v368
        %v385 = vcvt.s32.f32 %v369
        %v386 = vcvt.s32.f32 %v370
        %v387 = vcvt.s32.f32 %v371
        %v388 = vcvt.s32.f32 %v372
        %v389 = vcvt.s32.f32 %v373
        %v390 = vcvt.s32.f32 %v374
        %v391 = vcvt.s32.f32 %v375
        %v392 = vcvt.s32.f32 %v376
        %v393 = vcvt.s32.f32 %v377
        %v394 = vcvt.s32.f32 %v378
        %v395 = vcvt.s32.f32 %v379
        %v396 = vcvt.s32.f32 %v380
        %v397 = vcvt.s32.f32 %v381
        %v398 = vmax.f32 %v296, %v300
        %v399 = vmax.f32 %v298, %v302
        %v400 = vmax.f32 %v398, %v304
        %v401 = vmax.f32 %v399, %v306
        %v402 = vmax.f32 %v400, %v308
        %vm403 = vcmask 1042432
        %v404 = vsel %vm403, %v310, -inf
        %v405 = vmax.f32 %v401, %v404
        %v406 = vmax.f32 %v402, %v405
        %v407 = vrot.slane %v406, 4
        %v408 = vmax.f32 %v406, %v407
        %v409 = vrot.slane %v408, 2
        %v410 = vmax.f32 %v408, %v409
        %v411 = vrot.slane %v410, 1
        %v412 = vmax.f32 %v410, %v411
        %v413 = vmax.f32 %v297, %v301
        %v414 = vmax.f32 %v299, %v303
        %v415 = vmax.f32 %v413, %v305
        %v416 = vmax.f32 %v414, %v307
        %v417 = vmax.f32 %v415, %v309
        %v418 = vsel %vm403, %v311, -inf
        %v419 = vmax.f32 %v416, %v418
        %v420 = vmax.f32 %v417, %v419
        %v421 = vrot.slane %v420, 4
        %v422 = vmax.f32 %v420, %v421
        %v423 = vrot.slane %v422, 2
        %v424 = vmax.f32 %v422, %v423
        %v425 = vrot.slane %v424, 1
        %v426 = vmax.f32 %v424, %v425
        %v427 = vsub.f32 %v296, %v412
        %v428 = vsub.f32 %v297, %v426
        %v429 = vsub.f32 %v298, %v412
        %v430 = vsub.f32 %v299, %v426
        %v431 = vsub.f32 %v300, %v412
        %v432 = vsub.f32 %v301, %v426
        %v433 = vsub.f32 %v302, %v412
        %v434 = vsub.f32 %v303, %v426
        %v435 = vsub.f32 %v304, %v412
        %v436 = vsub.f32 %v305, %v426
        %v437 = vsub.f32 %v306, %v412
        %v438 = vsub.f32 %v307, %v426
        %v439 = vsub.f32 %v308, %v412
        %v440 = vsub.f32 %v309, %v426
        %v441 = vsub.f32 %v310, %v412
        %v442 = vsub.f32 %v311, %v426
        %v443 = vmul.f32 %v427, 1.442695
        %v444 = vpow.pop %v443
        %v445 = vmul.f32 %v428, 1.442695
        %v446 = vpow.pop %v445
        %v447 = vmul.f32 %v429, 1.442695
        %v448 = vpow.pop %v447
        %v449 = vmul.f32 %v430, 1.442695
        %v450 = vpow.pop %v449
        %v451 = vmul.f32 %v431, 1.442695
        %v452 = vpow.pop %v451
        %v453 = vmul.f32 %v432, 1.442695
        %v454 = vpow.pop %v453
        %v455 = vmul.f32 %v433, 1.442695
        %v456 = vpow.pop %v455
        %v457 = vmul.f32 %v434, 1.442695
        %v458 = vpow.pop %v457
        %v459 = vmul.f32 %v435, 1.442695
        %v460 = vpow.pop %v459
        %v461 = vmul.f32 %v436, 1.442695
        %v462 = vpow.pop %v461
        %v463 = vmul.f32 %v437, 1.442695
        %v464 = vpow.pop %v463
        %v465 = vmul.f32 %v438, 1.442695
        %v466 = vpow.pop %v465
        %v467 = vmul.f32 %v439, 1.442695
        %v468 = vpow.pop %v467
        %v469 = vmul.f32 %v440, 1.442695
        %v470 = vpow.pop %v469
        %v471 = vmul.f32 %v441, 1.442695
        %v472 = vpow.pop %v471
        %v473 = vmul.f32 %v442, 1.442695
        %v474 = vpow.pop %v473
        %v475 = vadd.f32 %v444, %v448
        %v476 = vadd.f32 %v475, %v452
        %v477 = vadd.f32 %v476, %v456
        %v478 = vadd.f32 %v477, %v460
        %v479 = vadd.f32 %v478, %v464
        %v480 = vadd.f32 %v479, %v468
        %v481 = vsel %vm403, %v472, 0.0
        %v482 = vadd.f32 %v480, %v481
        %v483 = vrot.slane %v482, 4
        %v484 = vadd.f32 %v482, %v483
        %v485 = vrot.slane %v484, 2
        %v486 = vadd.f32 %v484, %v485
        %v487 = vrot.slane %v486, 1
        %v488 = vadd.f32 %v486, %v487
        %v489 = vadd.f32 %v446, %v450
        %v490 = vadd.f32 %v489, %v454
        %v491 = vadd.f32 %v490, %v458
        %v492 = vadd.f32 %v491, %v462
        %v493 = vadd.f32 %v492, %v466
        %v494 = vadd.f32 %v493, %v470
        %v495 = vsel %vm403, %v474, 0.0
        %v496 = vadd.f32 %v494, %v495
        %v497 = vrot.slane %v496, 4
        %v498 = vadd.f32 %v496, %v497
        %v499 = vrot.slane %v498, 2
        %v500 = vadd.f32 %v498, %v499
        %v501 = vrot.slane %v500, 1
        %v502 = vadd.f32 %v500, %v501
        %v503 = vlog2.pop %v488
        %v504 = vmul.f32 %v503, 0.6931472
        %v505 = vlog2.pop %v502
        %v506 = vmul.f32 %v505, 0.6931472
        %v507 = vadd.f32 %v412, %v504
        %v508 = vadd.f32 %v426, %v506
        %v509 = vmul.f32 %v296, %v382
        %v510 = vmul.f32 %v297, %v383
        %v511 = vmul.f32 %v298, %v384
        %v512 = vmul.f32 %v299, %v385
        %v513 = vmul.f32 %v300, %v386
        %v514 = vmul.f32 %v301, %v387
        %v515 = vmul.f32 %v302, %v388
        %v516 = vmul.f32 %v303, %v389
        %v517 = vmul.f32 %v304, %v390
        %v518 = vmul.f32 %v305, %v391
        %v519 = vmul.f32 %v306, %v392
        %v520 = vmul.f32 %v307, %v393
        %v521 = vmul.f32 %v308, %v394
        %v522 = vmul.f32 %v309, %v395
        %v523 = vmul.f32 %v310, %v396
        %v524 = vmul.f32 %v311, %v397
        %v525 = vadd.f32 %v509, %v511
        %v526 = vadd.f32 %v525, %v513
        %v527 = vadd.f32 %v526, %v515
        %v528 = vadd.f32 %v527, %v517
        %v529 = vadd.f32 %v528, %v519
        %v530 = vadd.f32 %v529, %v521
        %v531 = vsel %vm403, %v523, 0.0
        %v532 = vadd.f32 %v530, %v531
        %v533 = vrot.slane %v532, 4
        %v534 = vadd.f32 %v532, %v533
        %v535 = vrot.slane %v534, 2
        %v536 = vadd.f32 %v534, %v535
        %v537 = vrot.slane %v536, 1
        %v538 = vadd.f32 %v536, %v537
        %v539 = vadd.f32 %v510, %v512
        %v540 = vadd.f32 %v539, %v514
        %v541 = vadd.f32 %v540, %v516
        %v542 = vadd.f32 %v541, %v518
        %v543 = vadd.f32 %v542, %v520
        %v544 = vadd.f32 %v543, %v522
        %v545 = vsel %vm403, %v524, 0.0
        %v546 = vadd.f32 %v544, %v545
        %v547 = vrot.slane %v546, 4
        %v548 = vadd.f32 %v546, %v547
        %v549 = vrot.slane %v548, 2
        %v550 = vadd.f32 %v548, %v549
        %v551 = vrot.slane %v550, 1
        %v552 = vadd.f32 %v550, %v551
        %v553 = vsub.f32 %v507, %v538
        %v554 = vsub.f32 %v508, %v552
        %v555 = vmax.f32 %v312, %v316
        %v556 = vmax.f32 %v314, %v318
        %v557 = vmax.f32 %v555, %v320
        %v558 = vmax.f32 %v556, %v322
        %v559 = vmax.f32 %v557, %v324
        %v560 = vsel %vm403, %v326, -inf
        %v561 = vmax.f32 %v558, %v560
        %v562 = vmax.f32 %v559, %v561
        %v563 = vrot.slane %v562, 4
        %v564 = vmax.f32 %v562, %v563
        %v565 = vrot.slane %v564, 2
        %v566 = vmax.f32 %v564, %v565
        %v567 = vrot.slane %v566, 1
        %v568 = vmax.f32 %v566, %v567
        %v569 = vmax.f32 %v313, %v317
        %v570 = vmax.f32 %v315, %v319
        %v571 = vmax.f32 %v569, %v321
        %v572 = vmax.f32 %v570, %v323
        %v573 = vmax.f32 %v571, %v325
        %v574 = vsel %vm403, %v327, -inf
        %v575 = vmax.f32 %v572, %v574
        %v576 = vmax.f32 %v573, %v575
        %v577 = vrot.slane %v576, 4
        %v578 = vmax.f32 %v576, %v577
        %v579 = vrot.slane %v578, 2
        %v580 = vmax.f32 %v578, %v579
        %v581 = vrot.slane %v580, 1
        %v582 = vmax.f32 %v580, %v581
        %v583 = vsub.f32 %v312, %v568
        %v584 = vsub.f32 %v313, %v582
        %v585 = vsub.f32 %v314, %v568
        %v586 = vsub.f32 %v315, %v582
        %v587 = vsub.f32 %v316, %v568
        %v588 = vsub.f32 %v317, %v582
        %v589 = vsub.f32 %v318, %v568
        %v590 = vsub.f32 %v319, %v582
        %v591 = vsub.f32 %v320, %v568
        %v592 = vsub.f32 %v321, %v582
        %v593 = vsub.f32 %v322, %v568
        %v594 = vsub.f32 %v323, %v582
        %v595 = vsub.f32 %v324, %v568
        %v596 = vsub.f32 %v325, %v582
        %v597 = vsub.f32 %v326, %v568
        %v598 = vsub.f32 %v327, %v582
        %v599 = vmul.f32 %v583, 1.442695
        %v600 = vpow.pop %v599
        %v601 = vmul.f32 %v584, 1.442695
        %v602 = vpow.pop %v601
        %v603 = vmul.f32 %v585, 1.442695
        %v604 = vpow.pop %v603
        %v605 = vmul.f32 %v586, 1.442695
        %v606 = vpow.pop %v605
        %v607 = vmul.f32 %v587, 1.442695
        %v608 = vpow.pop %v607
        %v609 = vmul.f32 %v588, 1.442695
        %v610 = vpow.pop %v609
        %v611 = vmul.f32 %v589, 1.442695
        %v612 = vpow.pop %v611
        %v613 = vmul.f32 %v590, 1.442695
        %v614 = vpow.pop %v613
        %v615 = vmul.f32 %v591, 1.442695
        %v616 = vpow.pop %v615
        %v617 = vmul.f32 %v592, 1.442695
        %v618 = vpow.pop %v617
        %v619 = vmul.f32 %v593, 1.442695
        %v620 = vpow.pop %v619
        %v621 = vmul.f32 %v594, 1.442695
        %v622 = vpow.pop %v621
        %v623 = vmul.f32 %v595, 1.442695
        %v624 = vpow.pop %v623
        %v625 = vmul.f32 %v596, 1.442695
        %v626 = vpow.pop %v625
        %v627 = vmul.f32 %v597, 1.442695
        %v628 = vpow.pop %v627
        %v629 = vmul.f32 %v598, 1.442695
        %v630 = vpow.pop %v629
        %v631 = vadd.f32 %v600, %v604
        %v632 = vadd.f32 %v631, %v608
        %v633 = vadd.f32 %v632, %v612
        %v634 = vadd.f32 %v633, %v616
        %v635 = vadd.f32 %v634, %v620
        %v636 = vadd.f32 %v635, %v624
        %v637 = vsel %vm403, %v628, 0.0
        %v638 = vadd.f32 %v636, %v637
        %v639 = vrot.slane %v638, 4
        %v640 = vadd.f32 %v638, %v639
        %v641 = vrot.slane %v640, 2
        %v642 = vadd.f32 %v640, %v641
        %v643 = vrot.slane %v642, 1
        %v644 = vadd.f32 %v642, %v643
        %v645 = vadd.f32 %v602, %v606
        %v646 = vadd.f32 %v645, %v610
        %v647 = vadd.f32 %v646, %v614
        %v648 = vadd.f32 %v647, %v618
        %v649 = vadd.f32 %v648, %v622
        %v650 = vadd.f32 %v649, %v626
        %v651 = vsel %vm403, %v630, 0.0
        %v652 = vadd.f32 %v650, %v651
        %v653 = vrot.slane %v652, 4
        %v654 = vadd.f32 %v652, %v653
        %v655 = vrot.slane %v654, 2
        %v656 = vadd.f32 %v654, %v655
        %v657 = vrot.slane %v656, 1
        %v658 = vadd.f32 %v656, %v657
        %v659 = vlog2.pop %v644
        %v660 = vmul.f32 %v659, 0.6931472
        %v661 = vlog2.pop %v658
        %v662 = vmul.f32 %v661, 0.6931472
        %v663 = vadd.f32 %v568, %v660
        %v664 = vadd.f32 %v582, %v662
        %v665 = vmul.f32 %v312, %v382
        %v666 = vmul.f32 %v313, %v383
        %v667 = vmul.f32 %v314, %v384
        %v668 = vmul.f32 %v315, %v385
        %v669 = vmul.f32 %v316, %v386
        %v670 = vmul.f32 %v317, %v387
        %v671 = vmul.f32 %v318, %v388
        %v672 = vmul.f32 %v319, %v389
        %v673 = vmul.f32 %v320, %v390
        %v674 = vmul.f32 %v321, %v391
        %v675 = vmul.f32 %v322, %v392
        %v676 = vmul.f32 %v323, %v393
        %v677 = vmul.f32 %v324, %v394
        %v678 = vmul.f32 %v325, %v395
        %v679 = vmul.f32 %v326, %v396
        %v680 = vmul.f32 %v327, %v397
        %v681 = vadd.f32 %v665, %v667
        %v682 = vadd.f32 %v681, %v669
        %v683 = vadd.f32 %v682, %v671
        %v684 = vadd.f32 %v683, %v673
        %v685 = vadd.f32 %v684, %v675
        %v686 = vadd.f32 %v685, %v677
        %v687 = vsel %vm403, %v679, 0.0
        %v688 = vadd.f32 %v686, %v687
        %v689 = vrot.slane %v688, 4
        %v690 = vadd.f32 %v688, %v689
        %v691 = vrot.slane %v690, 2
        %v692 = vadd.f32 %v690, %v691
        %v693 = vrot.slane %v692, 1
        %v694 = vadd.f32 %v692, %v693
        %v695 = vadd.f32 %v666, %v668
        %v696 = vadd.f32 %v695, %v670
        %v697 = vadd.f32 %v696, %v672
        %v698 = vadd.f32 %v697, %v674
        %v699 = vadd.f32 %v698, %v676
        %v700 = vadd.f32 %v699, %v678
        %v701 = vsel %vm403, %v680, 0.0
        %v702 = vadd.f32 %v700, %v701
        %v703 = vrot.slane %v702, 4
        %v704 = vadd.f32 %v702, %v703
        %v705 = vrot.slane %v704, 2
        %v706 = vadd.f32 %v704, %v705
        %v707 = vrot.slane %v706, 1
        %v708 = vadd.f32 %v706, %v707
        %v709 = vsub.f32 %v663, %v694
        %v710 = vsub.f32 %v664, %v708
        %v711 = vsub.f32 0.0, %v553
        %v712 = vsub.f32 0.0, %v554
        %v713 = vmul.f32 %v711, 1.442695
        %v714 = vpow.pop %v713
        %v715 = vmul.f32 %v712, 1.442695
        %v716 = vpow.pop %v715
        %v719 = vrot.slane %v716, 7
        %vm720 = vcmask 1040384
        %v721 = vsel %vm720, %v714, %v719
        %v723 = vsel %vm337, %v721, 1.0
        %725 = vset.pattern.permute.xlu0 0
        %726 = vperm.xlu0 %725, %v329
        %v727 = vpop.permute.xlu0 %726
        %730 = vset.pattern.permute.xlu0 0
        %731 = vperm.xlu0 %730, %v330
        %v732 = vpop.permute.xlu0 %731
        %735 = vset.pattern.permute.xlu0 0
        %736 = vperm.xlu0 %735, %v331
        %v737 = vpop.permute.xlu0 %736
        %740 = vset.pattern.permute.xlu0 0
        %741 = vperm.xlu0 %740, %v332
        %v742 = vpop.permute.xlu0 %741
        %745 = vset.pattern.permute.xlu0 0
        %746 = vperm.xlu0 %745, %v333
        %v747 = vpop.permute.xlu0 %746
        %750 = vset.pattern.permute.xlu0 0
        %751 = vperm.xlu0 %750, %v334
        %v752 = vpop.permute.xlu0 %751
        %755 = vset.pattern.permute.xlu0 0
        %756 = vperm.xlu0 %755, %v335
        %v757 = vpop.permute.xlu0 %756
        %760 = vset.pattern.permute.xlu0 0
        %761 = vperm.xlu0 %760, %v336
        %v762 = vpop.permute.xlu0 %761
        %v764 = vmul.f32 %v727, %v382
        %v765 = vmul.f32 %v727, %v383
        %v766 = vmul.f32 %v732, %v384
        %v767 = vmul.f32 %v732, %v385
        %v768 = vmul.f32 %v737, %v386
        %v769 = vmul.f32 %v737, %v387
        %v770 = vmul.f32 %v742, %v388
        %v771 = vmul.f32 %v742, %v389
        %v772 = vmul.f32 %v747, %v390
        %v773 = vmul.f32 %v747, %v391
        %v774 = vmul.f32 %v752, %v392
        %v775 = vmul.f32 %v752, %v393
        %v776 = vmul.f32 %v757, %v394
        %v777 = vmul.f32 %v757, %v395
        %v778 = vmul.f32 %v762, %v396
        %v779 = vmul.f32 %v762, %v397
        %v780 = vadd.f32 %v764, %v766
        %v781 = vadd.f32 %v780, %v768
        %v782 = vadd.f32 %v781, %v770
        %v783 = vadd.f32 %v782, %v772
        %v784 = vadd.f32 %v783, %v774
        %v785 = vadd.f32 %v784, %v776
        %v786 = vsel %vm403, %v778, 0.0
        %v787 = vadd.f32 %v785, %v786
        %v788 = vrot.slane %v787, 4
        %v789 = vadd.f32 %v787, %v788
        %v790 = vrot.slane %v789, 2
        %v791 = vadd.f32 %v789, %v790
        %v792 = vrot.slane %v791, 1
        %v793 = vadd.f32 %v791, %v792
        %v794 = vadd.f32 %v765, %v767
        %v795 = vadd.f32 %v794, %v769
        %v796 = vadd.f32 %v795, %v771
        %v797 = vadd.f32 %v796, %v773
        %v798 = vadd.f32 %v797, %v775
        %v799 = vadd.f32 %v798, %v777
        %v800 = vsel %vm403, %v779, 0.0
        %v801 = vadd.f32 %v799, %v800
        %v802 = vrot.slane %v801, 4
        %v803 = vadd.f32 %v801, %v802
        %v804 = vrot.slane %v803, 2
        %v805 = vadd.f32 %v803, %v804
        %v806 = vrot.slane %v805, 1
        %v807 = vadd.f32 %v805, %v806
        %v809 = vperm.slane %v723, 0
        %v810 = vperm.slane %v723, 1
        %v813 = vsel %vm720, %v809, %v553
        %v814 = vsel %vm720, %v810, %v554
        %vm815 = vcmask 1041408
        %v816 = vsel %vm815, %v813, %v709
        %v817 = vsel %vm815, %v814, %v710
        %v818 = vsel %vm403, %v816, %v793
        %v819 = vsel %vm403, %v817, %v807
        %v822 = vrot.slane %v819, 4
        %vm823 = vcmask 1043456
        %v824 = vsel %vm823, %v818, %v822
        %826 = vst [vmem:[%s265] sm:$0xff] %v824
        %s827 = sand.u32 %s145, 1
        %s828 = scalar_lea.sflag [#allocation3], %s827
        %s829 = sand.u32 %s145, 1
        %s830 = smul.addr %s829, 8
        %s831 = scalar_lea.vmem [#allocation2], %s830
        // Predicated region
        $region37: #{tpu_custom_call.1} parent=35 // pred_check
          %p832 = pneg %p155
        $region38: #{tpu_custom_call.1} parent=35 // pred_check_branch
          %834 = sbr.rel (%p832) target = $region40
        $region39: #{tpu_custom_call.1} parent=35 // pred_region
          %s835 = smul.u32 2, %s23
          %837 = vsyncadd %s828, 0
          %s838 = smul.addr %s22, 2
          %s839 = sadd.s32 %s835, %s838
          %s840 = smul.addr %s839, 4
          %s841 = scalar_lea.hbm %s4, %s840
          %s843 = sshll.u32 %s831, 4
          %s844 = int_to_ptr.vmem [resolvable:$true] %s843
          %s845 = sshll.u32 %s841, 4
          %s846 = int_to_ptr.hbm [resolvable:$true] %s845
          %848 = dma.vmem_to_hbm [thread:$0]  %s844, 128, %s846, %s828
        $region40: #{tpu_custom_call.1} parent=35 // pred_fallthru
          _
      $region36: #{tpu_custom_call.1} parent=5 // pred_fallthru
        _
      %p849 = scmp.le.s32.totalorder 2, %s13
      // Predicated region
      $region41: #{tpu_custom_call.1} parent=5 // pred_check
        %p850 = pneg %p849
      $region42: #{tpu_custom_call.1} parent=5 // pred_check_branch
        %852 = sbr.rel (%p850) target = $region44
      $region43: #{tpu_custom_call.1} parent=5 // pred_region
        %s853 = ssub.s32 %s13, 2
        // Predicated region
        $region45: #{tpu_custom_call.1} parent=43 // pred_check
          %p854 = pneg %p161
        $region46: #{tpu_custom_call.1} parent=43 // pred_check_branch
          %856 = sbr.rel (%p854) target = $region48
        $region47: #{tpu_custom_call.1} parent=43 // pred_region
          %s857 = sand.u32 %s146, 1
          %s858 = scalar_lea.sflag [#allocation3], %s857
          %s859 = sand.u32 %s146, 1
          %s860 = smul.addr %s859, 8
          %s861 = scalar_lea.vmem [#allocation2], %s860
          %863 = dma.done %s858, 128
        $region48: #{tpu_custom_call.1} parent=43 // pred_fallthru
          _
      $region44: #{tpu_custom_call.1} parent=5 // pred_fallthru
        _
    $region6: #{tpu_custom_call.1} parent=1 // loop_footer
      %s17 = sadd.s32 1, %s13
    $region7: #{tpu_custom_call.1} parent=1 // loop_footer_branch
      %12 = sbr.rel target = $region3
    $region8: #{tpu_custom_call.1} parent=1 // loop_exit
      _
    %864 = vsyncpa [#allocation3], 1
    %s865 = scalar_lea.sflag [#allocation3], 1
    %866 = vsyncpa %s865, 1

</llo_original>
